<compile_context>
chip_gen: v7x
topology: tpu7x:2x2x1
jax: 0.10.0
libtpu: 0.0.40
codegen_flags: <defaults>
</compile_context>

<pallas_src>
from functools import partial
from math import pi

import jax
import jax.numpy as jnp
from jax.experimental import pallas as pl
from jax.experimental.pallas import tpu as pltpu

# ---- module config (baked in as Python constants) ----------------------------
NTHETAS = 16           # unused in forward
MAX_ANGLE = pi / 2.0
MIN_SIGMA = 0.01
NO_SIGMOID = False
LINEAR_SIGMAS = False
SIGN = 1.0

# ---- demo shapes --------------------------------------------------------------
B = 8          # batch
D_IN = 16      # beam_net input features
HIDDEN = 32    # beam_net hidden width
OUTPUTS = 8    # beam_net output width (>= 5; cols 5: passed through)

LANE = 128
SUBLANE = 8


def _round_up(n, m):
    return ((n + m - 1) // m) * m


def _cdiv(a, b):
    return -(-a // b)


# ---- kernel -------------------------------------------------------------------
def normalnet_kernel(x_ref, p_ref, out_ref, *, d_in, d_in_pad, h_pad, out_pad,
                     outputs, sign, max_angle, min_sigma, no_sigmoid,
                     linear_sigmas):
    # ---- beam_net: relu(x @ W1 + b1) @ W2 + b2; biases broadcast-added in-kernel.
    x = x_ref[...].astype(jnp.float32)                       # (tb, d_in)
    if d_in_pad != d_in:                                      # never runs in demo
        x = jnp.concatenate(
            [x, jnp.zeros((x.shape[0], d_in_pad - d_in), jnp.float32)], axis=1)

    r = 0
    w1 = p_ref[r:r + d_in_pad, 0:h_pad]                       # (d_in_pad, h_pad)
    r += d_in_pad
    b1 = p_ref[r:r + 1, 0:h_pad]                               # (1, h_pad)
    r += SUBLANE
    w2 = p_ref[r:r + h_pad, 0:out_pad]                         # (h_pad, out_pad)
    r += h_pad
    b2 = p_ref[r:r + 1, 0:out_pad]                              # (1, out_pad)

    h = jnp.maximum(jnp.dot(x, w1, preferred_element_type=jnp.float32) + b1, 0.0)
    y = jnp.dot(h, w2, preferred_element_type=jnp.float32) + b2   # (tb, out_pad) f32

    # ---- fixify: full-tile elementwise + per-column select (no slicing/concat).
    y_sig = jax.nn.sigmoid(y)
    col = jax.lax.broadcasted_iota(jnp.int32, y.shape, dimension=1)

    if no_sigmoid:
        mean_vals = sign * y
    else:
        mean_vals = (sign * 4.0 * 2.0 * max_angle) * (y_sig - 0.5)
    if linear_sigmas:
        sigmas = jnp.maximum(y, 0.0) + min_sigma
    else:
        sigmas = y_sig + min_sigma
    # Column 4 needs 1 - y_sig[:, 3]: one cheap XLU lane rotation
    # (rolled[:, 4] == y_sig[:, 3]; verified by the allclose test below).
    col4_vals = 1.0 - pltpu.roll(y_sig, shift=1, axis=1)

    out = jnp.where(col == 0, mean_vals,
          jnp.where(col <= 2, sigmas,
          jnp.where(col == 3, y_sig,
          jnp.where(col == 4, col4_vals, y))))
    # Trim to the real OUTPUTS columns before the store: masked in-VMEM stores,
    # but the HBM writeback carries only outputs*4 bytes/row (16x less).
    out_ref[...] = out[:, :outputs].astype(out_ref.dtype)


# ---- one-time parameter packing (init-time, NOT per-call) ---------------------
def pack_params(w1, b1, w2, b2):
    """Pack W1 / b1 / W2 / b2 into a single VMEM-resident buffer.

    Row layout (width = max(h_pad, out_pad), all f32, zero-padded):
      [0,                d_in_pad)                 : W1
      [d_in_pad,         d_in_pad + 8)             : b1 (row 0 of the segment)
      [d_in_pad + 8,     d_in_pad + 8 + h_pad)     : W2
      [d_in_pad + 8 + h_pad, + 8)                  : b2 (row 0 of the segment)
    """
    d_in, hidden = w1.shape
    outputs = w2.shape[1]
    d_in_pad = _round_up(d_in, SUBLANE)
    h_pad = _round_up(hidden, LANE)
    out_pad = _round_up(outputs, LANE)
    width = max(h_pad, out_pad)
    rows = d_in_pad + SUBLANE + h_pad + SUBLANE

    p = jnp.zeros((rows, width), jnp.float32)
    p = p.at[:d_in, :hidden].set(w1.astype(jnp.float32))
    p = p.at[d_in_pad, :hidden].set(b1.reshape(-1).astype(jnp.float32))
    p = p.at[d_in_pad + SUBLANE:d_in_pad + SUBLANE + hidden, :outputs].set(
        w2.astype(jnp.float32))
    p = p.at[d_in_pad + SUBLANE + h_pad, :outputs].set(
        b2.reshape(-1).astype(jnp.float32))
    return p


# ---- batch tiling -------------------------------------------------------------
def _pick_batch_tile(batch, tb_max):
    batch8 = _round_up(batch, SUBLANE)
    steps = max(1, _cdiv(batch8, _round_up(tb_max, SUBLANE)))
    # v7x megacore: keep at least 2 grid steps whenever there is enough batch
    # so the "parallel" axis can shard across both TensorCores (harmless on
    # single-TC v5e/v6e).
    if batch8 >= 2 * SUBLANE:
        steps = max(steps, 2)
    tb = _round_up(_cdiv(batch8, steps), SUBLANE)
    batch_pad = _round_up(batch, tb)
    return tb, batch_pad


# ---- forward wrapper ----------------------------------------------------------
def normalnet_forward(x, params, *, outputs, tb_max=2048):
    batch, d_in = x.shape
    assert outputs >= 5, "fixify passes through _y[:, 5:]"

    d_in_pad = _round_up(d_in, SUBLANE)
    p_rows, p_width = params.shape
    h_pad = p_rows - d_in_pad - 2 * SUBLANE
    out_pad = _round_up(outputs, LANE)
    assert h_pad % LANE == 0 and h_pad > 0
    assert out_pad <= p_width

    tb, batch_pad = _pick_batch_tile(batch, tb_max)

    xf = x.astype(jnp.float32)
    if batch_pad != batch:
        # Only when batch doesn't divide the tile; padded rows produce garbage
        # that the row slice below discards.
        xf = jnp.pad(xf, ((0, batch_pad - batch), (0, 0)))

    kernel = partial(
        normalnet_kernel,
        d_in=d_in, d_in_pad=d_in_pad, h_pad=h_pad, out_pad=out_pad,
        outputs=outputs, sign=SIGN, max_angle=MAX_ANGLE, min_sigma=MIN_SIGMA,
        no_sigmoid=NO_SIGMOID, linear_sigmas=LINEAR_SIGMAS,
    )

    out = pl.pallas_call(
        kernel,
        out_shape=jax.ShapeDtypeStruct((batch_pad, outputs), jnp.float32),
        grid_spec=pltpu.PrefetchScalarGridSpec(
            num_scalar_prefetch=0,
            grid=(batch_pad // tb,),
            in_specs=[
                pl.BlockSpec((tb, d_in), lambda i: (i, 0)),
                # constant block index -> params stay VMEM-resident (no re-DMA)
                pl.BlockSpec((p_rows, p_width), lambda i: (0, 0)),
            ],
            out_specs=pl.BlockSpec((tb, outputs), lambda i: (i, 0)),
        ),
        compiler_params=pltpu.CompilerParams(
            dimension_semantics=("parallel",)),
    )(xf, params)

    if batch_pad != batch:
        out = out[:batch]
    return out


# ---- plain-JAX reference for a correctness sanity check -----------------------
def normalnet_reference(x, w1, b1, w2, b2):
    h = jnp.maximum(x @ w1 + b1, 0.0)
    y = h @ w2 + b2
    y_sig = jax.nn.sigmoid(y)
    if NO_SIGMOID:
        mean_values = SIGN * y[:, 0:1]
    else:
        mean_values = SIGN * (y_sig[:, 0:1] - 0.5) * 4.0 * (2.0 * MAX_ANGLE)
    if not LINEAR_SIGMAS:
        sigmas = y_sig[:, 1:3] + MIN_SIGMA
    else:
        sigmas = jnp.maximum(y[:, 1:3], 0.0) + MIN_SIGMA
    return jnp.concatenate(
        [mean_values, sigmas, y_sig[:, 3:4], 1.0 - y_sig[:, 3:4], y[:, 5:]], axis=1)


if __name__ == "__main__":
    key = jax.random.PRNGKey(0)
    kx, k1, kb1, k2, kb2 = jax.random.split(key, 5)

    x = jax.random.normal(kx, (B, D_IN), dtype=jnp.float32)
    # deterministic beam_net parameters (synthetic, not a checkpoint load)
    w1 = jax.random.normal(k1, (D_IN, HIDDEN), dtype=jnp.float32) * (1.0 / jnp.sqrt(D_IN))
    b1 = jax.random.normal(kb1, (1, HIDDEN), dtype=jnp.float32) * 0.01
    w2 = jax.random.normal(k2, (HIDDEN, OUTPUTS), dtype=jnp.float32) * (1.0 / jnp.sqrt(HIDDEN))
    b2 = jax.random.normal(kb2, (1, OUTPUTS), dtype=jnp.float32) * 0.01

    # Parameter packing happens ONCE here (init time), not per forward call.
    params = jax.block_until_ready(pack_params(w1, b1, w2, b2))

    fwd = jax.jit(partial(normalnet_forward, outputs=OUTPUTS))
    out = jax.block_until_ready(fwd(x, params))
    ref = normalnet_reference(x, w1, b1, w2, b2)

    assert out.shape == (B, OUTPUTS)
    assert jnp.allclose(out, ref, atol=2e-5, rtol=2e-5), "mismatch vs reference"

    print("KERNEL_OK")
</pallas_src>

<mosaic_0001>
module attributes {stable_mosaic.version = 11 : i64} {
  func.func @normalnet_kernel(%arg0: i32, %arg1: memref<8x16xf32, #tpu.memory_space<vmem>>, %arg2: memref<160x128xf32, #tpu.memory_space<vmem>>, %arg3: memref<8x8xf32, #tpu.memory_space<vmem>>) attributes {dimension_semantics = [#tpu.dimension_semantics<parallel>], iteration_bounds = array<i64: 1>, scalar_prefetch = 0 : i64, scratch_operands = 0 : i64, tpu.core_type = #tpu.core_type<tc>, window_params = [{transform_indices = @transform_0, window_bounds = array<i64: 8, 16>}, {pipeline_mode = #tpu.pipeline_mode<synchronous>, transform_indices = @transform_1, window_bounds = array<i64: 160, 128>}, {transform_indices = @transform_2, window_bounds = array<i64: 8, 8>}]} {
    %c0 = arith.constant 0 : index
    %c0_0 = arith.constant 0 : index
    %0 = vector.load %arg1[%c0, %c0_0] : memref<8x16xf32, #tpu.memory_space<vmem>>, vector<8x16xf32>
    %c0_1 = arith.constant 0 : index
    %c0_2 = arith.constant 0 : index
    %1 = vector.load %arg2[%c0_1, %c0_2] : memref<160x128xf32, #tpu.memory_space<vmem>>, vector<16x128xf32>
    %c16 = arith.constant 16 : index
    %c0_3 = arith.constant 0 : index
    %2 = vector.load %arg2[%c16, %c0_3] : memref<160x128xf32, #tpu.memory_space<vmem>>, vector<1x128xf32>
    %c24 = arith.constant 24 : index
    %c0_4 = arith.constant 0 : index
    %3 = vector.load %arg2[%c24, %c0_4] : memref<160x128xf32, #tpu.memory_space<vmem>>, vector<128x128xf32>
    %c152 = arith.constant 152 : index
    %c0_5 = arith.constant 0 : index
    %4 = vector.load %arg2[%c152, %c0_5] : memref<160x128xf32, #tpu.memory_space<vmem>>, vector<1x128xf32>
    %cst = arith.constant dense<0.000000e+00> : vector<8x128xf32>
    %5 = tpu.matmul %0, %1, %cst {dimension_numbers = #tpu.dot_dimension_numbers<[1], [0], [0], [1], [0, 0, 1, 1], [], []>} : vector<8x16xf32>, vector<16x128xf32>, vector<8x128xf32> -> vector<8x128xf32>
    %6 = vector.broadcast %2 : vector<1x128xf32> to vector<8x128xf32>
    %7 = arith.addf %5, %6 : vector<8x128xf32>
    %cst_6 = arith.constant 0.000000e+00 : f32
    %8 = vector.broadcast %cst_6 : f32 to vector<8x128xf32>
    %9 = arith.maximumf %7, %8 : vector<8x128xf32>
    %cst_7 = arith.constant dense<0.000000e+00> : vector<8x128xf32>
    %10 = tpu.matmul %9, %3, %cst_7 {dimension_numbers = #tpu.dot_dimension_numbers<[1], [0], [0], [1], [0, 0, 1, 1], [], []>} : vector<8x128xf32>, vector<128x128xf32>, vector<8x128xf32> -> vector<8x128xf32>
    %11 = vector.broadcast %4 : vector<1x128xf32> to vector<8x128xf32>
    %12 = arith.addf %10, %11 : vector<8x128xf32>
    %13 = arith.negf %12 : vector<8x128xf32>
    %14 = math.exp %13 : vector<8x128xf32>
    %cst_8 = arith.constant 1.000000e+00 : f32
    %15 = vector.broadcast %cst_8 : f32 to vector<8x128xf32>
    %16 = arith.addf %15, %14 : vector<8x128xf32>
    %17 = arith.divf %15, %16 : vector<8x128xf32>
    %18 = tpu.iota {dimensions = array<i32: 1>} : vector<8x128xi32>
    %cst_9 = arith.constant 5.000000e-01 : f32
    %19 = vector.broadcast %cst_9 : f32 to vector<8x128xf32>
    %20 = arith.subf %17, %19 : vector<8x128xf32>
    %cst_10 = arith.constant 12.566371 : f32
    %21 = vector.broadcast %cst_10 : f32 to vector<8x128xf32>
    %22 = arith.mulf %21, %20 : vector<8x128xf32>
    %cst_11 = arith.constant 0.00999999977 : f32
    %23 = vector.broadcast %cst_11 : f32 to vector<8x128xf32>
    %24 = arith.addf %17, %23 : vector<8x128xf32>
    %c1_i32 = arith.constant 1 : i32
    %25 = tpu.dynamic_rotate %17 by %c1_i32 dim 1 : vector<8x128xf32>, i32 -> vector<8x128xf32>
    %cst_12 = arith.constant 1.000000e+00 : f32
    %26 = vector.broadcast %cst_12 : f32 to vector<8x128xf32>
    %27 = arith.subf %26, %25 : vector<8x128xf32>
    %c0_i32 = arith.constant 0 : i32
    %28 = vector.broadcast %c0_i32 : i32 to vector<8x128xi32>
    %29 = arith.cmpi eq, %18, %28 : vector<8x128xi32>
    %c2_i32 = arith.constant 2 : i32
    %30 = vector.broadcast %c2_i32 : i32 to vector<8x128xi32>
    %31 = arith.cmpi sle, %18, %30 : vector<8x128xi32>
    %c3_i32 = arith.constant 3 : i32
    %32 = vector.broadcast %c3_i32 : i32 to vector<8x128xi32>
    %33 = arith.cmpi eq, %18, %32 : vector<8x128xi32>
    %c4_i32 = arith.constant 4 : i32
    %34 = vector.broadcast %c4_i32 : i32 to vector<8x128xi32>
    %35 = arith.cmpi eq, %18, %34 : vector<8x128xi32>
    %36 = arith.select %35, %27, %12 : vector<8x128xi1>, vector<8x128xf32>
    %37 = arith.select %33, %17, %36 : vector<8x128xi1>, vector<8x128xf32>
    %38 = arith.select %31, %24, %37 : vector<8x128xi1>, vector<8x128xf32>
    %39 = arith.select %29, %22, %38 : vector<8x128xi1>, vector<8x128xf32>
    %40 = vector.extract_strided_slice %39 {offsets = [0, 0], sizes = [8, 8], strides = [1, 1]} : vector<8x128xf32> to vector<8x8xf32>
    %c0_13 = arith.constant 0 : index
    %c0_14 = arith.constant 0 : index
    %41 = vector.load %arg3[%c0_13, %c0_14] : memref<8x8xf32, #tpu.memory_space<vmem>>, vector<8x8xf32>
    tpu.vector_store %arg3[%c0_13, %c0_14], %40 {strides = array<i32>} : memref<8x8xf32, #tpu.memory_space<vmem>>, vector<8x8xf32>,
    return
  }
  func.func @transform_0(%arg0: i32) -> (i32, i32) {
    %c0_i32 = arith.constant 0 : i32
    %c0_i32_0 = arith.constant 0 : i32
    return %arg0, %c0_i32 : i32, i32
  }
  func.func @transform_1(%arg0: i32) -> (i32, i32) {
    %c0_i32 = arith.constant 0 : i32
    %c0_i32_0 = arith.constant 0 : i32
    %c0_i32_1 = arith.constant 0 : i32
    return %c0_i32, %c0_i32_0 : i32, i32
  }
  func.func @transform_2(%arg0: i32) -> (i32, i32) {
    %c0_i32 = arith.constant 0 : i32
    %c0_i32_0 = arith.constant 0 : i32
    return %arg0, %c0_i32 : i32, i32
  }
}

</mosaic_0001>

<llo_original>
// kernel: normalnet_forward.1
$region0: #{normalnet_forward.1}
  #allocation0 [shape = 'u32[]', space=smem, size = 0x4, offset = 0x4, fixed_abs, tag = 'smem constant byte address 0x4 - core index']
  #allocation1 [shape = 'u32[144,128]{1,0:T(1,128)}', space=vmem, size = 0x12000, scoped, tag = 'internal scratch']
  %s0 = inlined_call_operand.hbm [shape: f32[8,16], index: 0, kind: input, shape index: {}]
  %s1 = inlined_call_operand.hbm [shape: f32[160,128], index: 1, kind: input, shape index: {}]
  %s2 = inlined_call_operand.hbm [shape: f32[8,8], index: 2, kind: output, shape index: {}]
  %s3 = sld [smem:[#allocation0]]
  $region26: #{normalnet_forward.1} parent=0
    _
  %s5 = ssub.s32 1, %s3
  %s6 = scalar_select 0, %s5, %s3
  $region1: #{normalnet_forward.1} parent=0
    #allocation2 [shape = 'u8[4096]{0}', space=vmem, size = 0x1000, scoped, tag = 'input window, operand 0, single buffered']
    #allocation3 [shape = 's32[1]{0}', space=sflag, size = 0x4, scoped, tag = 'scoped memory for normalnet_forward.1']
    #allocation4 [shape = 's32[1]{0}', space=sflag, size = 0x4, scoped, tag = 'scoped memory for normalnet_forward.1']
    #allocation5 [shape = 'u8[81920]{0}', space=vmem, size = 0x14000, scoped, tag = 'input window, operand 1, single buffered']
    #allocation6 [shape = 's32[1]{0}', space=sflag, size = 0x4, scoped, tag = 'scoped memory for normalnet_forward.1']
    #allocation7 [shape = 'u8[4096]{0}', space=vmem, size = 0x1000, scoped, tag = 'output window, operand 0, single buffered']
    %7 = vsyncpa [#allocation3], 0
    %8 = vsyncpa [#allocation6], 0
    %9 = vsyncpa [#allocation4], 0
    // Predicated region
    $region2: #{normalnet_forward.1} parent=1 // pred_check
      _
    $region3: #{normalnet_forward.1} parent=1 // pred_check_branch
      %11 = sbr.rel (0) target = $region5
    $region4: #{normalnet_forward.1} parent=1 // pred_region
      %s13 = ssub.s32 128, 128
      %14 = vsyncadd [#allocation3], %s13
      %s16 = sshll.u32 [#allocation2], 4
      %s17 = int_to_ptr.vmem [resolvable:$true] %s16
      %19 = dma.hbm_to_vmem [thread:$0]  %s0, 128, %s17, [#allocation3]
    $region5: #{normalnet_forward.1} parent=1 // pred_fallthru
      _
    // Predicated region
    $region6: #{normalnet_forward.1} parent=1 // pred_check
      _
    $region7: #{normalnet_forward.1} parent=1 // pred_check_branch
      %21 = sbr.rel (0) target = $region9
    $region8: #{normalnet_forward.1} parent=1 // pred_region
      %s23 = ssub.s32 2560, 2560
      %24 = vsyncadd [#allocation6], %s23
      %s25 = sshll.u32 [#allocation5], 4
      %s26 = int_to_ptr.vmem [resolvable:$true] %s25
      %31 = dma.hbm_to_vmem [thread:$0]  %s1, 2560, %s26, [#allocation6], 128, 128, 8
    $region9: #{normalnet_forward.1} parent=1 // pred_fallthru
      _
    // Predicated region
    $region10: #{normalnet_forward.1} parent=1 // pred_check
      _
    $region11: #{normalnet_forward.1} parent=1 // pred_check_branch
      %33 = sbr.rel (0) target = $region13
    $region12: #{normalnet_forward.1} parent=1 // pred_region
      %34 = dma.done [#allocation3], 128
    $region13: #{normalnet_forward.1} parent=1 // pred_fallthru
      _
    // Predicated region
    $region14: #{normalnet_forward.1} parent=1 // pred_check
      _
    $region15: #{normalnet_forward.1} parent=1 // pred_check_branch
      %36 = sbr.rel (0) target = $region17
    $region16: #{normalnet_forward.1} parent=1 // pred_region
      %37 = dma.done [#allocation6], 2560
    $region17: #{normalnet_forward.1} parent=1 // pred_fallthru
      _
    %v38 = vld [vmem:[#allocation2] sm:$0xff]
    %v39 = vld [vmem:[#allocation5] sm:$0xff]
    %v40 = vld [vmem:[#allocation5 + $0x8] sm:$0xff]
    %v41 = vld [vmem:[#allocation5 + $0x10] sm:$0x1]
    %v42 = vld [vmem:[#allocation5 + $0x18] sm:$0xff]
    %v43 = vld [vmem:[#allocation5 + $0x20] sm:$0xff]
    %v44 = vld [vmem:[#allocation5 + $0x28] sm:$0xff]
    %v45 = vld [vmem:[#allocation5 + $0x30] sm:$0xff]
    %v46 = vld [vmem:[#allocation5 + $0x38] sm:$0xff]
    %v47 = vld [vmem:[#allocation5 + $0x40] sm:$0xff]
    %v48 = vld [vmem:[#allocation5 + $0x48] sm:$0xff]
    %v49 = vld [vmem:[#allocation5 + $0x50] sm:$0xff]
    %v50 = vld [vmem:[#allocation5 + $0x58] sm:$0xff]
    %v51 = vld [vmem:[#allocation5 + $0x60] sm:$0xff]
    %v52 = vld [vmem:[#allocation5 + $0x68] sm:$0xff]
    %v53 = vld [vmem:[#allocation5 + $0x70] sm:$0xff]
    %v54 = vld [vmem:[#allocation5 + $0x78] sm:$0xff]
    %v55 = vld [vmem:[#allocation5 + $0x80] sm:$0xff]
    %v56 = vld [vmem:[#allocation5 + $0x88] sm:$0xff]
    %v57 = vld [vmem:[#allocation5 + $0x90] sm:$0xff]
    %v58 = vld [vmem:[#allocation5 + $0x98] sm:$0x1]
    %v59 = vlaneseq
    %v60 = vshrl.u32 %v59, 7
    %v61 = vsub.s32 0, %v60
    %v62 = vrot.slane %v41, %v61
    %vm63 = vcmask 130048
    %v65 = vsel %vm63, %v38, 0
    %67 = vmatprep.subr.mxu0 0.0
    %68 = vmatpush1.msra.mxu0 %v39
    %69 = vmatprep.subr.mxu0 0.0
    %70 = vmatpush1.msra.mxu0 %v40
    %71 = vmatprep.subr.mxu0 0.0
    %72 = vmatpush1.msra.mxu0 0.0
    %73 = vmatprep.subr.mxu0 0.0
    %74 = vmatpush1.msra.mxu0 0.0
    %75 = vmatprep.subr.mxu0 0.0
    %76 = vmatpush1.msra.mxu0 0.0
    %77 = vmatprep.subr.mxu0 0.0
    %78 = vmatpush1.msra.mxu0 0.0
    %79 = vmatprep.subr.mxu0 0.0
    %80 = vmatpush1.msra.mxu0 0.0
    %81 = vmatprep.subr.mxu0 0.0
    %82 = vmatpush1.msra.mxu0 0.0
    %83 = vmatprep.subr.mxu0 0.0
    %84 = vmatpush1.msra.mxu0 0.0
    %85 = vmatprep.subr.mxu0 0.0
    %86 = vmatpush1.msra.mxu0 0.0
    %87 = vmatprep.subr.mxu0 0.0
    %88 = vmatpush1.msra.mxu0 0.0
    %89 = vmatprep.subr.mxu0 0.0
    %90 = vmatpush1.msra.mxu0 0.0
    %91 = vmatprep.subr.mxu0 0.0
    %92 = vmatpush1.msra.mxu0 0.0
    %93 = vmatprep.subr.mxu0 0.0
    %94 = vmatpush1.msra.mxu0 0.0
    %95 = vmatprep.subr.mxu0 0.0
    %96 = vmatpush1.msra.mxu0 0.0
    %97 = vmatprep.subr.mxu0 0.0
    %98 = vmatpush1.msra.mxu0 0.0
    %99 = vmatprep.subr.mxu0 0.0
    %100 = vmatpush1.msra.mxu0 0.0
    %101 = vmatprep.subr.mxu0 0.0
    %102 = vmatpush1.msra.mxu0 0.0
    %103 = vmatprep.subr.mxu0 0.0
    %104 = vmatpush1.msra.mxu0 0.0
    %105 = vmatprep.subr.mxu0 0.0
    %106 = vmatpush1.msra.mxu0 0.0
    %107 = vmatprep.subr.mxu0 0.0
    %108 = vmatpush1.msra.mxu0 0.0
    %109 = vmatprep.subr.mxu0 0.0
    %110 = vmatpush1.msra.mxu0 0.0
    %111 = vmatprep.subr.mxu0 0.0
    %112 = vmatpush1.msra.mxu0 0.0
    %113 = vmatprep.subr.mxu0 0.0
    %114 = vmatpush1.msra.mxu0 0.0
    %115 = vmatprep.subr.mxu0 0.0
    %116 = vmatpush1.msra.mxu0 0.0
    %117 = vmatprep.subr.mxu0 0.0
    %118 = vmatpush1.msra.mxu0 0.0
    %119 = vmatprep.subr.mxu0 0.0
    %120 = vmatpush1.msra.mxu0 0.0
    %121 = vmatprep.subr.mxu0 0.0
    %122 = vmatpush1.msra.mxu0 0.0
    %123 = vmatprep.subr.mxu0 0.0
    %124 = vmatpush1.msra.mxu0 0.0
    %125 = vmatprep.subr.mxu0 0.0
    %126 = vmatpush1.msra.mxu0 0.0
    %127 = vmatprep.subr.mxu0 0.0
    %128 = vmatpush1.msra.mxu0 0.0
    %129 = vmatprep.subr.mxu0 0.0
    %130 = vmatpush1.msra.mxu0 0.0
    %131 = vmatprep.mubr.f32.mxu0 0.0
    %132 = vmatmul.mubr.f32.gmra.mrb[0].mxu0 %v65
    %v133 = vpop.f32.mrb[0].mxu0
    %v134 = vadd.f32 %v62, %v133
    %v135 = vpop.f32.mrb[0].mxu0
    %136 = vdwg.mxu0
    %v137 = vmax.f32 %v134, 0.0
    %v138 = vlaneseq
    %v139 = vshrl.u32 %v138, 7
    %v140 = vsub.s32 0, %v139
    %v141 = vrot.slane %v58, %v140
    %142 = vmatprep.subr.mxu0 0.0
    %143 = vmatpush1.msra.mxu0 %v42
    %144 = vmatprep.subr.mxu0 0.0
    %145 = vmatpush1.msra.mxu0 %v43
    %146 = vmatprep.subr.mxu0 0.0
    %147 = vmatpush1.msra.mxu0 %v44
    %148 = vmatprep.subr.mxu0 0.0
    %149 = vmatpush1.msra.mxu0 %v45
    %150 = vmatprep.subr.mxu0 0.0
    %151 = vmatpush1.msra.mxu0 %v46
    %152 = vmatprep.subr.mxu0 0.0
    %153 = vmatpush1.msra.mxu0 %v47
    %154 = vmatprep.subr.mxu0 0.0
    %155 = vmatpush1.msra.mxu0 %v48
    %156 = vmatprep.subr.mxu0 0.0
    %157 = vmatpush1.msra.mxu0 %v49
    %158 = vmatprep.subr.mxu0 0.0
    %159 = vmatpush1.msra.mxu0 %v50
    %160 = vmatprep.subr.mxu0 0.0
    %161 = vmatpush1.msra.mxu0 %v51
    %162 = vmatprep.subr.mxu0 0.0
    %163 = vmatpush1.msra.mxu0 %v52
    %164 = vmatprep.subr.mxu0 0.0
    %165 = vmatpush1.msra.mxu0 %v53
    %166 = vmatprep.subr.mxu0 0.0
    %167 = vmatpush1.msra.mxu0 %v54
    %168 = vmatprep.subr.mxu0 0.0
    %169 = vmatpush1.msra.mxu0 %v55
    %170 = vmatprep.subr.mxu0 0.0
    %171 = vmatpush1.msra.mxu0 %v56
    %172 = vmatprep.subr.mxu0 0.0
    %173 = vmatpush1.msra.mxu0 %v57
    %174 = vmatprep.subr.mxu0 0.0
    %175 = vmatpush1.msra.mxu0 0.0
    %176 = vmatprep.subr.mxu0 0.0
    %177 = vmatpush1.msra.mxu0 0.0
    %178 = vmatprep.subr.mxu0 0.0
    %179 = vmatpush1.msra.mxu0 0.0
    %180 = vmatprep.subr.mxu0 0.0
    %181 = vmatpush1.msra.mxu0 0.0
    %182 = vmatprep.subr.mxu0 0.0
    %183 = vmatpush1.msra.mxu0 0.0
    %184 = vmatprep.subr.mxu0 0.0
    %185 = vmatpush1.msra.mxu0 0.0
    %186 = vmatprep.subr.mxu0 0.0
    %187 = vmatpush1.msra.mxu0 0.0
    %188 = vmatprep.subr.mxu0 0.0
    %189 = vmatpush1.msra.mxu0 0.0
    %190 = vmatprep.subr.mxu0 0.0
    %191 = vmatpush1.msra.mxu0 0.0
    %192 = vmatprep.subr.mxu0 0.0
    %193 = vmatpush1.msra.mxu0 0.0
    %194 = vmatprep.subr.mxu0 0.0
    %195 = vmatpush1.msra.mxu0 0.0
    %196 = vmatprep.subr.mxu0 0.0
    %197 = vmatpush1.msra.mxu0 0.0
    %198 = vmatprep.subr.mxu0 0.0
    %199 = vmatpush1.msra.mxu0 0.0
    %200 = vmatprep.subr.mxu0 0.0
    %201 = vmatpush1.msra.mxu0 0.0
    %202 = vmatprep.subr.mxu0 0.0
    %203 = vmatpush1.msra.mxu0 0.0
    %204 = vmatprep.subr.mxu0 0.0
    %205 = vmatpush1.msra.mxu0 0.0
    %206 = vmatprep.mubr.f32.mxu0 0.0
    %207 = vmatmul.mubr.f32.gmra.mrb[0].mxu0 %v137
    %v208 = vpop.f32.mrb[0].mxu0
    %v209 = vadd.f32 %v141, %v208
    %v210 = vpop.f32.mrb[0].mxu0
    %211 = vdwg.mxu0
    %v212 = vxor.u32 %v209, 2147483648
    %v213 = vmul.f32 %v212, 1.442695
    %v214 = vpow.pop %v213
    %v215 = vadd.f32 %v214, 1.0
    %v216 = vrcp.pop %v215
    %v217 = vmul.f32 1.0, %v216
    %v218 = vlaneseq
    %v219 = vand.u32 %v218, 127
    %v220 = vsub.f32 %v217, 0.5
    %v221 = vmul.f32 %v220, 12.566371
    %v222 = vadd.f32 %v217, 0.01
    %223 = vrot.lane.b32.xlu0 %v217, 1
    %v224 = vpop.permute.xlu0 %223
    %v225 = vsub.f32 1.0, %v224
    %vm226 = vcmp.eq.s32.totalorder %v219, 0
    %vm227 = vcmp.le.s32.totalorder %v219, 2
    %vm228 = vcmp.eq.s32.totalorder %v219, 3
    %vm229 = vcmp.eq.s32.totalorder %v219, 4
    %v230 = vsel %vm229, %v225, %v209
    %v231 = vsel %vm228, %v217, %v230
    %v232 = vsel %vm227, %v222, %v231
    %v233 = vsel %vm226, %v221, %v232
    %vm234 = vcmask 64512
    %235 = vst.msk [vmem:[#allocation7] sm:$0xff] %vm234, %v233
    // Predicated region
    $region18: #{normalnet_forward.1} parent=1 // pred_check
      _
    $region19: #{normalnet_forward.1} parent=1 // pred_check_branch
      %237 = sbr.rel (0) target = $region21
    $region20: #{normalnet_forward.1} parent=1 // pred_region
      %s239 = ssub.s32 128, 128
      %240 = vsyncadd [#allocation4], %s239
      %s242 = sshll.u32 [#allocation7], 4
      %s243 = int_to_ptr.vmem [resolvable:$true] %s242
      %245 = dma.vmem_to_hbm [thread:$0]  %s243, 128, %s2, [#allocation4]
    $region21: #{normalnet_forward.1} parent=1 // pred_fallthru
      _
    // Predicated region
    $region22: #{normalnet_forward.1} parent=1 // pred_check
      _
    $region23: #{normalnet_forward.1} parent=1 // pred_check_branch
      %247 = sbr.rel (0) target = $region25
    $region24: #{normalnet_forward.1} parent=1 // pred_region
      %248 = dma.done [#allocation4], 128
    $region25: #{normalnet_forward.1} parent=1 // pred_fallthru
      _
    %249 = vsyncpa [#allocation3], 1
    %250 = vsyncpa [#allocation6], 1
    %251 = vsyncpa [#allocation4], 1

</llo_original>
